<compile_context>
chip_gen: v5e
topology: v5e:2x2
jax: 0.10.0
libtpu: 0.0.40
codegen_flags: <defaults>
</compile_context>

<pallas_src>
import jax
import jax.numpy as jnp
from jax.experimental import pallas as pl
from jax.experimental.pallas import tpu as pltpu

LANE = 128


def _cdiv(a, b):
    return (a + b - 1) // b


def _round_up(n, m):
    return _cdiv(n, m) * m


def _fused_affine_kernel(x_ref, w_ref, b_ref, o_ref):
    # x is f32 in VMEM; cast to the MXU compute dtype (bf16) in-register, accumulate in
    # f32, add the f32 fused bias, store lane-dense in the (bf16) output dtype.
    x = x_ref[...].astype(w_ref.dtype)
    acc = jnp.dot(x, w_ref[...], preferred_element_type=jnp.float32)
    o_ref[...] = (acc + b_ref[...]).astype(o_ref.dtype)


def _batch_dimension_semantics(num_tiles):
    """CORE_PARALLEL on v7x (2 TensorCores/chip) when there is work to split."""
    kind = ""
    try:
        kind = jax.devices()[0].device_kind.lower()
    except Exception:
        pass
    if num_tiles >= 2 and "v7" in kind:
        return (pltpu.CORE_PARALLEL,)
    return ("parallel",)


def that_mnist_net_forward(x, params, *, batch_tile=1024,
                           compute_dtype=jnp.bfloat16,
                           store_dtype=jnp.bfloat16):
    """4-layer (activation-free) MLP forward as a single fused Pallas matmul kernel.

    x:      (B, in_dim) float32
    params: dict with w1..w4 of shape (in_features, out_features) and b1..b4 of shape
            (1, out_features)   (PyTorch weights pre-transposed to (in, out)).
    Returns (B, out_dim) float32.
    """
    B, in_dim = x.shape
    out_dim = params["w4"].shape[1]

    # --- Fold the affine chain once, in f32 (one bf16 rounding instead of four). -------
    w_fused = params["w1"] @ params["w2"] @ params["w3"] @ params["w4"]        # (in_dim, out_dim)
    b_fused = ((params["b1"] @ params["w2"] + params["b2"]) @ params["w3"]
               + params["b3"]) @ params["w4"] + params["b4"]                   # (1, out_dim)

    out_pad = _round_up(out_dim, LANE)                      # lane-dense output slab
    w_p = jnp.pad(w_fused, ((0, 0), (0, out_pad - out_dim))).astype(compute_dtype)
    b_p = jnp.pad(b_fused, ((0, 0), (0, out_pad - out_dim))).astype(jnp.float32)

    # --- Batch tiling: x stays f32 and feature-unpadded; only the batch dim may pad. ---
    num_tiles = max(_cdiv(B, batch_tile), 1)
    if num_tiles == 1 and B >= 512:
        num_tiles = 2                                       # keep both v7x TCs busy
    tile = _round_up(_cdiv(B, num_tiles), 8)                # f32 sublane granularity
    if num_tiles == 1 and tile != B:
        tile = B                                            # full-extent block: no padding
    B_pad = tile * num_tiles
    x_in = x if B_pad == B else jnp.pad(x, ((0, B_pad - B), (0, 0)))

    const_map = lambda i: (0, 0)                            # weights DMA'd once, revisited

    compiler_kwargs = dict(dimension_semantics=_batch_dimension_semantics(num_tiles))
    # Double-buffered x tile dominates VMEM; raise the scoped limit only if needed
    # (v5e's default scoped VMEM is 16 MiB).
    vmem_need = 2 * tile * in_dim * 4 + 2 * tile * out_pad * 2 + w_p.size * 2 + (1 << 16)
    if vmem_need > 12 * 1024 * 1024:
        compiler_kwargs["vmem_limit_bytes"] = min(int(vmem_need * 1.5), 64 * 1024 * 1024)

    out = pl.pallas_call(
        _fused_affine_kernel,
        out_shape=jax.ShapeDtypeStruct((B_pad, out_pad), store_dtype),
        grid_spec=pltpu.PrefetchScalarGridSpec(
            num_scalar_prefetch=0,
            grid=(num_tiles,),
            in_specs=[
                pl.BlockSpec((tile, in_dim), lambda i: (i, 0)),   # x: feature dim untouched
                pl.BlockSpec(w_p.shape, const_map),
                pl.BlockSpec(b_p.shape, const_map),
            ],
            out_specs=pl.BlockSpec((tile, out_pad), lambda i: (i, 0)),
        ),
        compiler_params=pltpu.CompilerParams(**compiler_kwargs),
    )(x_in, w_p, b_p)

    # Slice the real logits off the lane-dense slab; return f32 (PyTorch semantics).
    return out[:B, :out_dim].astype(jnp.float32)


def init_params(key, in_dim, out_dim):
    """PyTorch-style uniform(+/- 1/sqrt(fan_in)) init for the 4 Linear layers.

    Weights stored transposed: (in_features, out_features); biases: (1, out_features).
    """
    dims = [in_dim, 64, 128, 32, out_dim]
    params = {}
    for i in range(4):
        fan_in, fan_out = dims[i], dims[i + 1]
        key, kw, kb = jax.random.split(key, 3)
        bound = 1.0 / jnp.sqrt(fan_in)
        params[f"w{i + 1}"] = jax.random.uniform(
            kw, (fan_in, fan_out), jnp.float32, minval=-bound, maxval=bound)
        params[f"b{i + 1}"] = jax.random.uniform(
            kb, (1, fan_out), jnp.float32, minval=-bound, maxval=bound)
    return params


def forward_ref_f32(x, params):
    """Pure-f32, layer-by-layer reference (mirrors the PyTorch module)."""
    h = x
    for i in range(1, 5):
        h = h @ params[f"w{i}"] + params[f"b{i}"]
    return h


def forward_ref_mixed(x, params, compute_dtype=jnp.bfloat16, store_dtype=jnp.bfloat16):
    """Plain-JAX reference mirroring the kernel's fused f32 / bf16-operand math."""
    w_fused = params["w1"] @ params["w2"] @ params["w3"] @ params["w4"]
    b_fused = ((params["b1"] @ params["w2"] + params["b2"]) @ params["w3"]
               + params["b3"]) @ params["w4"] + params["b4"]
    y = jnp.dot(x.astype(compute_dtype), w_fused.astype(compute_dtype),
                preferred_element_type=jnp.float32) + b_fused
    return y.astype(store_dtype).astype(jnp.float32)


if __name__ == "__main__":
    key = jax.random.PRNGKey(0)

    # MNIST-like but small: batch=32, in_dim=784 (flattened 28x28), out_dim=10 classes.
    batch, in_dim, out_dim = 32, 784, 10

    key, kx = jax.random.split(key)
    x = jax.random.normal(kx, (batch, in_dim), jnp.float32)
    params = init_params(key, in_dim, out_dim)

    out = that_mnist_net_forward(x, params)
    out = jax.block_until_ready(out)
    assert out.shape == (batch, out_dim)

    # Tight check vs a reference that mirrors the kernel's mixed-precision math.
    ref_mixed = forward_ref_mixed(x, params)
    assert jnp.allclose(out, ref_mixed, atol=1e-2, rtol=1e-2), \
        "mismatch vs mixed-precision reference"

    # Looser check vs the pure-f32 math of the original PyTorch module.
    ref_f32 = forward_ref_f32(x, params)
    assert jnp.allclose(out, ref_f32, atol=2e-2, rtol=5e-2), "mismatch vs f32 reference"

    # TODO(synk): Adam optimizer and CrossEntropyLoss in the module are training-only
    # members (and test() is an eval loop), not part of forward(), so not implemented here.
    print("KERNEL_OK")
</pallas_src>

<mosaic_0001>
module attributes {stable_mosaic.version = 11 : i64} {
  func.func @_fused_affine_kernel(%arg0: i32, %arg1: memref<32x784xf32, #tpu.memory_space<vmem>>, %arg2: memref<784x128xbf16, #tpu.memory_space<vmem>>, %arg3: memref<1x128xf32, #tpu.memory_space<vmem>>, %arg4: memref<32x128xbf16, #tpu.memory_space<vmem>>) attributes {dimension_semantics = [#tpu.dimension_semantics<parallel>], iteration_bounds = array<i64: 1>, scalar_prefetch = 0 : i64, scratch_operands = 0 : i64, tpu.core_type = #tpu.core_type<tc>, window_params = [{transform_indices = @transform_0, window_bounds = array<i64: 32, 784>}, {pipeline_mode = #tpu.pipeline_mode<synchronous>, transform_indices = @transform_1, window_bounds = array<i64: 784, 128>}, {pipeline_mode = #tpu.pipeline_mode<synchronous>, transform_indices = @transform_2, window_bounds = array<i64: 1, 128>}, {transform_indices = @transform_3, window_bounds = array<i64: 32, 128>}]} {
    %c0 = arith.constant 0 : index
    %c0_0 = arith.constant 0 : index
    %0 = vector.load %arg1[%c0, %c0_0] : memref<32x784xf32, #tpu.memory_space<vmem>>, vector<32x784xf32>
    %1 = arith.truncf %0 : vector<32x784xf32> to vector<32x784xbf16>
    %c0_1 = arith.constant 0 : index
    %c0_2 = arith.constant 0 : index
    %2 = vector.load %arg2[%c0_1, %c0_2] : memref<784x128xbf16, #tpu.memory_space<vmem>>, vector<784x128xbf16>
    %cst = arith.constant dense<0.000000e+00> : vector<32x128xf32>
    %3 = tpu.matmul %1, %2, %cst {dimension_numbers = #tpu.dot_dimension_numbers<[1], [0], [0], [1], [0, 0, 1, 1], [], []>} : vector<32x784xbf16>, vector<784x128xbf16>, vector<32x128xf32> -> vector<32x128xf32>
    %c0_3 = arith.constant 0 : index
    %c0_4 = arith.constant 0 : index
    %4 = vector.load %arg3[%c0_3, %c0_4] : memref<1x128xf32, #tpu.memory_space<vmem>>, vector<1x128xf32>
    %5 = vector.broadcast %4 : vector<1x128xf32> to vector<32x128xf32>
    %6 = arith.addf %3, %5 : vector<32x128xf32>
    %7 = arith.truncf %6 : vector<32x128xf32> to vector<32x128xbf16>
    %c0_5 = arith.constant 0 : index
    %c0_6 = arith.constant 0 : index
    %8 = vector.load %arg4[%c0_5, %c0_6] : memref<32x128xbf16, #tpu.memory_space<vmem>>, vector<32x128xbf16>
    tpu.vector_store %arg4[%c0_5, %c0_6], %7 {strides = array<i32>} : memref<32x128xbf16, #tpu.memory_space<vmem>>, vector<32x128xbf16>,
    return
  }
  func.func @transform_0(%arg0: i32) -> (i32, i32) {
    %c0_i32 = arith.constant 0 : i32
    %c0_i32_0 = arith.constant 0 : i32
    return %arg0, %c0_i32 : i32, i32
  }
  func.func @transform_1(%arg0: i32) -> (i32, i32) {
    %c0_i32 = arith.constant 0 : i32
    %c0_i32_0 = arith.constant 0 : i32
    %c0_i32_1 = arith.constant 0 : i32
    return %c0_i32, %c0_i32_0 : i32, i32
  }
  func.func @transform_2(%arg0: i32) -> (i32, i32) {
    %c0_i32 = arith.constant 0 : i32
    %c0_i32_0 = arith.constant 0 : i32
    %c0_i32_1 = arith.constant 0 : i32
    return %c0_i32, %c0_i32_0 : i32, i32
  }
  func.func @transform_3(%arg0: i32) -> (i32, i32) {
    %c0_i32 = arith.constant 0 : i32
    %c0_i32_0 = arith.constant 0 : i32
    return %arg0, %c0_i32 : i32, i32
  }
}

</mosaic_0001>

<llo_original>
// kernel: tpu_custom_call.1
$region0: #{tpu_custom_call.1}
  #allocation0 [shape = 'u32[]', space=smem, size = 0x4, offset = 0x4, fixed_abs, tag = 'smem constant byte address 0x4 - core index']
  #allocation1 [shape = 'u32[72,128]{1,0:T(1,128)}', space=vmem, size = 0x9000, scoped, tag = 'internal scratch']
  %s0 = inlined_call_operand.hbm [shape: f32[32,784], index: 0, kind: input, shape index: {}]
  %s1 = inlined_call_operand.hbm [shape: bf16[784,128], index: 1, kind: input, shape index: {}]
  %s2 = inlined_call_operand.vmem [shape: f32[1,128], index: 2, kind: input, shape index: {}]
  %s3 = inlined_call_operand.hbm [shape: bf16[32,128], index: 3, kind: output, shape index: {}]
  %s4 = sld [smem:[#allocation0]]
  $region30: #{tpu_custom_call.1} parent=0
    _
  %s6 = ssub.s32 1, %s4
  %s7 = scalar_select 0, %s6, %s4
  $region1: #{tpu_custom_call.1} parent=0
    #allocation2 [shape = 'u8[114688]{0}', space=vmem, size = 0x1c000, scoped, tag = 'input window, operand 0, single buffered']
    #allocation3 [shape = 's32[1]{0}', space=sflag, size = 0x4, scoped, tag = 'scoped memory for tpu_custom_call.1']
    #allocation4 [shape = 's32[1]{0}', space=sflag, size = 0x4, scoped, tag = 'scoped memory for tpu_custom_call.1']
    #allocation5 [shape = 'u8[200704]{0}', space=vmem, size = 0x31000, scoped, tag = 'input window, operand 1, single buffered']
    #allocation6 [shape = 's32[1]{0}', space=sflag, size = 0x4, scoped, tag = 'scoped memory for tpu_custom_call.1']
    #allocation7 [shape = 'u8[8192]{0}', space=vmem, size = 0x2000, scoped, tag = 'output window, operand 0, single buffered']
    %8 = vsyncpa [#allocation3], 0
    %9 = vsyncpa [#allocation6], 0
    %10 = vsyncpa [#allocation4], 0
    // Predicated region
    $region2: #{tpu_custom_call.1} parent=1 // pred_check
      _
    $region3: #{tpu_custom_call.1} parent=1 // pred_check_branch
      %12 = sbr.rel (0) target = $region5
    $region4: #{tpu_custom_call.1} parent=1 // pred_region
      %14 = vsyncadd [#allocation3], 0
      %s15 = sshll.u32 %s0, 4
      %s16 = int_to_ptr.hbm [resolvable:$true] %s15
      %s17 = sshll.u32 [#allocation2], 4
      %s18 = int_to_ptr.vmem [resolvable:$true] %s17
      %23 = dma.hbm_to_vmem [thread:$0]  %s16, 3584, %s18, [#allocation3], 896, 896, 56
    $region5: #{tpu_custom_call.1} parent=1 // pred_fallthru
      _
    // Predicated region
    $region6: #{tpu_custom_call.1} parent=1 // pred_check
      _
    $region7: #{tpu_custom_call.1} parent=1 // pred_check_branch
      %25 = sbr.rel (0) target = $region9
    $region8: #{tpu_custom_call.1} parent=1 // pred_region
      %27 = vsyncadd [#allocation6], 0
      %s28 = sshll.u32 %s1, 4
      %s29 = int_to_ptr.hbm [resolvable:$true] %s28
      %s30 = sshll.u32 [#allocation5], 4
      %s31 = int_to_ptr.vmem [resolvable:$true] %s30
      %36 = dma.hbm_to_vmem [thread:$0]  %s29, 6272, %s31, [#allocation6], 64, 64, 4
    $region9: #{tpu_custom_call.1} parent=1 // pred_fallthru
      _
    // Predicated region
    $region10: #{tpu_custom_call.1} parent=1 // pred_check
      _
    $region11: #{tpu_custom_call.1} parent=1 // pred_check_branch
      %38 = sbr.rel (0) target = $region13
    $region12: #{tpu_custom_call.1} parent=1 // pred_region
      _
    $region13: #{tpu_custom_call.1} parent=1 // pred_fallthru
      _
    // Predicated region
    $region14: #{tpu_custom_call.1} parent=1 // pred_check
      _
    $region15: #{tpu_custom_call.1} parent=1 // pred_check_branch
      %40 = sbr.rel (0) target = $region17
    $region16: #{tpu_custom_call.1} parent=1 // pred_region
      %42 = dma.done [#allocation3], 3584
    $region17: #{tpu_custom_call.1} parent=1 // pred_fallthru
      _
    // Predicated region
    $region18: #{tpu_custom_call.1} parent=1 // pred_check
      _
    $region19: #{tpu_custom_call.1} parent=1 // pred_check_branch
      %44 = sbr.rel (0) target = $region21
    $region20: #{tpu_custom_call.1} parent=1 // pred_region
      %46 = dma.done [#allocation6], 6272
    $region21: #{tpu_custom_call.1} parent=1 // pred_fallthru
      _
    %v48 = vld [vmem:[#allocation2] sm:$0xff]
    %v49 = vld [vmem:[#allocation2 + $0x8] sm:$0xff]
    %v50 = vld [vmem:[#allocation2 + $0x10] sm:$0xff]
    %v51 = vld [vmem:[#allocation2 + $0x18] sm:$0xff]
    %v52 = vld [vmem:[#allocation2 + $0x20] sm:$0xff]
    %v53 = vld [vmem:[#allocation2 + $0x28] sm:$0xff]
    %v54 = vld [vmem:[#allocation2 + $0x30] sm:$0xff]
    %v55 = vld [vmem:[#allocation2 + $0x38] sm:$0xff]
    %v56 = vld [vmem:[#allocation2 + $0x40] sm:$0xff]
    %v57 = vld [vmem:[#allocation2 + $0x48] sm:$0xff]
    %v58 = vld [vmem:[#allocation2 + $0x50] sm:$0xff]
    %v59 = vld [vmem:[#allocation2 + $0x58] sm:$0xff]
    %v60 = vld [vmem:[#allocation2 + $0x60] sm:$0xff]
    %v61 = vld [vmem:[#allocation2 + $0x68] sm:$0xff]
    %v62 = vld [vmem:[#allocation2 + $0x70] sm:$0xff]
    %v63 = vld [vmem:[#allocation2 + $0x78] sm:$0xff]
    %v64 = vld [vmem:[#allocation2 + $0x80] sm:$0xff]
    %v65 = vld [vmem:[#allocation2 + $0x88] sm:$0xff]
    %v66 = vld [vmem:[#allocation2 + $0x90] sm:$0xff]
    %v67 = vld [vmem:[#allocation2 + $0x98] sm:$0xff]
    %v68 = vld [vmem:[#allocation2 + $0xa0] sm:$0xff]
    %v69 = vld [vmem:[#allocation2 + $0xa8] sm:$0xff]
    %v70 = vld [vmem:[#allocation2 + $0xb0] sm:$0xff]
    %v71 = vld [vmem:[#allocation2 + $0xb8] sm:$0xff]
    %v72 = vld [vmem:[#allocation2 + $0xc0] sm:$0xff]
    %v73 = vld [vmem:[#allocation2 + $0xc8] sm:$0xff]
    %v74 = vld [vmem:[#allocation2 + $0xd0] sm:$0xff]
    %v75 = vld [vmem:[#allocation2 + $0xd8] sm:$0xff]
    %v76 = vpack.c.bf16 %v55, %v48
    %v77 = vpack.c.bf16 %v56, %v49
    %v78 = vpack.c.bf16 %v57, %v50
    %v79 = vpack.c.bf16 %v58, %v51
    %v80 = vpack.c.bf16 %v59, %v52
    %v81 = vpack.c.bf16 %v60, %v53
    %v82 = vpack.c.bf16 %v61, %v54
    %v83 = vpack.c.bf16 %v69, %v62
    %v84 = vpack.c.bf16 %v70, %v63
    %v85 = vpack.c.bf16 %v71, %v64
    %v86 = vpack.c.bf16 %v72, %v65
    %v87 = vpack.c.bf16 %v73, %v66
    %v88 = vpack.c.bf16 %v74, %v67
    %v89 = vpack.c.bf16 %v75, %v68
    %v90 = vld [vmem:[#allocation5] sm:$0xf]
    %v91 = vld [vmem:[#allocation5 + $0x4] sm:$0xf]
    %v92 = vld [vmem:[#allocation5 + $0x8] sm:$0xf]
    %v93 = vld [vmem:[#allocation5 + $0xc] sm:$0xf]
    %v94 = vld [vmem:[#allocation5 + $0x10] sm:$0xf]
    %v95 = vld [vmem:[#allocation5 + $0x14] sm:$0xf]
    %v96 = vld [vmem:[#allocation5 + $0x18] sm:$0xf]
    %v97 = vld [vmem:[#allocation5 + $0x1c] sm:$0xf]
    %v98 = vld [vmem:[#allocation5 + $0x20] sm:$0xf]
    %v99 = vld [vmem:[#allocation5 + $0x24] sm:$0xf]
    %v100 = vld [vmem:[#allocation5 + $0x28] sm:$0xf]
    %v101 = vld [vmem:[#allocation5 + $0x2c] sm:$0xf]
    %v102 = vld [vmem:[#allocation5 + $0x30] sm:$0xf]
    %v103 = vld [vmem:[#allocation5 + $0x34] sm:$0xf]
    %v104 = vld [vmem:[#allocation5 + $0x38] sm:$0xf]
    %v105 = vld [vmem:[#allocation5 + $0x3c] sm:$0xf]
    %v106 = vld [vmem:[#allocation5 + $0x40] sm:$0xf]
    %v107 = vld [vmem:[#allocation5 + $0x44] sm:$0xf]
    %v108 = vld [vmem:[#allocation5 + $0x48] sm:$0xf]
    %v109 = vld [vmem:[#allocation5 + $0x4c] sm:$0xf]
    %v110 = vld [vmem:[#allocation5 + $0x50] sm:$0xf]
    %v111 = vld [vmem:[#allocation5 + $0x54] sm:$0xf]
    %v112 = vld [vmem:[#allocation5 + $0x58] sm:$0xf]
    %v113 = vld [vmem:[#allocation5 + $0x5c] sm:$0xf]
    %v114 = vld [vmem:[#allocation5 + $0x60] sm:$0xf]
    %v115 = vld [vmem:[#allocation5 + $0x64] sm:$0xf]
    %v116 = vld [vmem:[#allocation5 + $0x68] sm:$0xf]
    %v117 = vld [vmem:[#allocation5 + $0x6c] sm:$0xf]
    %v118 = vld [vmem:[#allocation5 + $0x70] sm:$0xf]
    %v119 = vld [vmem:[#allocation5 + $0x74] sm:$0xf]
    %v120 = vld [vmem:[#allocation5 + $0x78] sm:$0xf]
    %v121 = vld [vmem:[#allocation5 + $0x7c] sm:$0xf]
    %v122 = vld [vmem:[#allocation5 + $0x80] sm:$0xf]
    %v123 = vld [vmem:[#allocation5 + $0x84] sm:$0xf]
    %v124 = vld [vmem:[#allocation5 + $0x88] sm:$0xf]
    %v125 = vld [vmem:[#allocation5 + $0x8c] sm:$0xf]
    %v126 = vld [vmem:[#allocation5 + $0x90] sm:$0xf]
    %v127 = vld [vmem:[#allocation5 + $0x94] sm:$0xf]
    %v128 = vld [vmem:[#allocation5 + $0x98] sm:$0xf]
    %v129 = vld [vmem:[#allocation5 + $0x9c] sm:$0xf]
    %v130 = vld [vmem:[#allocation5 + $0xa0] sm:$0xf]
    %v131 = vld [vmem:[#allocation5 + $0xa4] sm:$0xf]
    %v132 = vld [vmem:[#allocation5 + $0xa8] sm:$0xf]
    %v133 = vld [vmem:[#allocation5 + $0xac] sm:$0xf]
    %v134 = vld [vmem:[#allocation5 + $0xb0] sm:$0xf]
    %v135 = vld [vmem:[#allocation5 + $0xb4] sm:$0xf]
    %v136 = vld [vmem:[#allocation5 + $0xb8] sm:$0xf]
    %v137 = vld [vmem:[#allocation5 + $0xbc] sm:$0xf]
    %v138 = vld [vmem:[#allocation5 + $0xc0] sm:$0xf]
    %v139 = vld [vmem:[#allocation5 + $0xc4] sm:$0xf]
    %v140 = vld [vmem:[#allocation5 + $0xc8] sm:$0xf]
    %v141 = vld [vmem:[#allocation5 + $0xcc] sm:$0xf]
    %v142 = vld [vmem:[#allocation5 + $0xd0] sm:$0xf]
    %v143 = vld [vmem:[#allocation5 + $0xd4] sm:$0xf]
    %v144 = vld [vmem:[#allocation5 + $0xd8] sm:$0xf]
    %v145 = vld [vmem:[#allocation5 + $0xdc] sm:$0xf]
    %v146 = vld [vmem:[#allocation5 + $0xe0] sm:$0xf]
    %v147 = vld [vmem:[#allocation5 + $0xe4] sm:$0xf]
    %v148 = vld [vmem:[#allocation5 + $0xe8] sm:$0xf]
    %v149 = vld [vmem:[#allocation5 + $0xec] sm:$0xf]
    %v150 = vld [vmem:[#allocation5 + $0xf0] sm:$0xf]
    %v151 = vld [vmem:[#allocation5 + $0xf4] sm:$0xf]
    %v152 = vld [vmem:[#allocation5 + $0xf8] sm:$0xf]
    %v153 = vld [vmem:[#allocation5 + $0xfc] sm:$0xf]
    %v154 = vld [vmem:[#allocation5 + $0x100] sm:$0xf]
    %v155 = vld [vmem:[#allocation5 + $0x104] sm:$0xf]
    %v156 = vld [vmem:[#allocation5 + $0x108] sm:$0xf]
    %v157 = vld [vmem:[#allocation5 + $0x10c] sm:$0xf]
    %v158 = vld [vmem:[#allocation5 + $0x110] sm:$0xf]
    %v159 = vld [vmem:[#allocation5 + $0x114] sm:$0xf]
    %v160 = vld [vmem:[#allocation5 + $0x118] sm:$0xf]
    %v161 = vld [vmem:[#allocation5 + $0x11c] sm:$0xf]
    %v162 = vld [vmem:[#allocation5 + $0x120] sm:$0xf]
    %v163 = vld [vmem:[#allocation5 + $0x124] sm:$0xf]
    %v164 = vld [vmem:[#allocation5 + $0x128] sm:$0xf]
    %v165 = vld [vmem:[#allocation5 + $0x12c] sm:$0xf]
    %v166 = vld [vmem:[#allocation5 + $0x130] sm:$0xf]
    %v167 = vld [vmem:[#allocation5 + $0x134] sm:$0xf]
    %v168 = vld [vmem:[#allocation5 + $0x138] sm:$0xf]
    %v169 = vld [vmem:[#allocation5 + $0x13c] sm:$0xf]
    %v170 = vld [vmem:[#allocation5 + $0x140] sm:$0xf]
    %v171 = vld [vmem:[#allocation5 + $0x144] sm:$0xf]
    %v172 = vld [vmem:[#allocation5 + $0x148] sm:$0xf]
    %v173 = vld [vmem:[#allocation5 + $0x14c] sm:$0xf]
    %v174 = vld [vmem:[#allocation5 + $0x150] sm:$0xf]
    %v175 = vld [vmem:[#allocation5 + $0x154] sm:$0xf]
    %v176 = vld [vmem:[#allocation5 + $0x158] sm:$0xf]
    %v177 = vld [vmem:[#allocation5 + $0x15c] sm:$0xf]
    %v178 = vld [vmem:[#allocation5 + $0x160] sm:$0xf]
    %v179 = vld [vmem:[#allocation5 + $0x164] sm:$0xf]
    %v180 = vld [vmem:[#allocation5 + $0x168] sm:$0xf]
    %v181 = vld [vmem:[#allocation5 + $0x16c] sm:$0xf]
    %v182 = vld [vmem:[#allocation5 + $0x170] sm:$0xf]
    %v183 = vld [vmem:[#allocation5 + $0x174] sm:$0xf]
    %v184 = vld [vmem:[#allocation5 + $0x178] sm:$0xf]
    %v185 = vld [vmem:[#allocation5 + $0x17c] sm:$0xf]
    %v186 = vld [vmem:[#allocation5 + $0x180] sm:$0xf]
    %v187 = vld [vmem:[#allocation5 + $0x184] sm:$0xf]
    %v188 = vld [vmem:[%s2] sm:$0x1]
    %v190 = vperm.slane %v188, 0
    %v290 = vunpack.c.l.b16 %v90
    %v291 = vunpack.c.l.b16 %v91
    %v292 = vunpack.c.l.b16 %v92
    %v293 = vunpack.c.l.b16 %v93
    %v294 = vunpack.c.l.b16 %v94
    %v295 = vunpack.c.l.b16 %v95
    %v296 = vunpack.c.l.b16 %v96
    %v297 = vunpack.c.l.b16 %v97
    %v298 = vunpack.c.l.b16 %v98
    %v299 = vunpack.c.l.b16 %v99
    %v300 = vunpack.c.l.b16 %v100
    %v301 = vunpack.c.l.b16 %v101
    %v302 = vunpack.c.l.b16 %v102
    %v303 = vunpack.c.l.b16 %v103
    %v304 = vunpack.c.l.b16 %v104
    %v305 = vunpack.c.l.b16 %v105
    %v306 = vunpack.c.l.b16 %v106
    %v307 = vunpack.c.l.b16 %v107
    %v308 = vunpack.c.l.b16 %v108
    %v309 = vunpack.c.l.b16 %v109
    %v310 = vunpack.c.l.b16 %v110
    %v311 = vunpack.c.l.b16 %v111
    %v312 = vunpack.c.l.b16 %v112
    %v313 = vunpack.c.l.b16 %v113
    %v314 = vunpack.c.l.b16 %v114
    %v315 = vunpack.c.l.b16 %v115
    %v316 = vunpack.c.l.b16 %v116
    %v317 = vunpack.c.l.b16 %v117
    %v318 = vunpack.c.l.b16 %v118
    %v319 = vunpack.c.l.b16 %v119
    %v320 = vunpack.c.l.b16 %v120
    %v321 = vunpack.c.l.b16 %v121
    %v322 = vunpack.c.l.b16 %v122
    %v323 = vunpack.c.l.b16 %v123
    %v324 = vunpack.c.l.b16 %v124
    %v325 = vunpack.c.l.b16 %v125
    %v326 = vunpack.c.l.b16 %v126
    %v327 = vunpack.c.l.b16 %v127
    %v328 = vunpack.c.l.b16 %v128
    %v329 = vunpack.c.l.b16 %v129
    %v330 = vunpack.c.l.b16 %v130
    %v331 = vunpack.c.l.b16 %v131
    %v332 = vunpack.c.l.b16 %v132
    %v333 = vunpack.c.l.b16 %v133
    %v334 = vunpack.c.l.b16 %v134
    %v335 = vunpack.c.l.b16 %v135
    %v336 = vunpack.c.l.b16 %v136
    %v337 = vunpack.c.l.b16 %v137
    %v338 = vunpack.c.l.b16 %v138
    %v339 = vunpack.c.l.b16 %v139
    %v340 = vunpack.c.l.b16 %v140
    %v341 = vunpack.c.l.b16 %v141
    %v342 = vunpack.c.l.b16 %v142
    %v343 = vunpack.c.l.b16 %v143
    %v344 = vunpack.c.l.b16 %v144
    %v345 = vunpack.c.l.b16 %v145
    %v346 = vunpack.c.l.b16 %v146
    %v347 = vunpack.c.l.b16 %v147
    %v348 = vunpack.c.l.b16 %v148
    %v349 = vunpack.c.l.b16 %v149
    %v350 = vunpack.c.l.b16 %v150
    %v351 = vunpack.c.l.b16 %v151
    %v352 = vunpack.c.l.b16 %v152
    %v353 = vunpack.c.l.b16 %v153
    %v354 = vunpack.c.l.b16 %v154
    %v355 = vunpack.c.l.b16 %v155
    %v356 = vunpack.c.l.b16 %v156
    %v357 = vunpack.c.l.b16 %v157
    %v358 = vunpack.c.l.b16 %v158
    %v359 = vunpack.c.l.b16 %v159
    %v360 = vunpack.c.l.b16 %v160
    %v361 = vunpack.c.l.b16 %v161
    %v362 = vunpack.c.l.b16 %v162
    %v363 = vunpack.c.l.b16 %v163
    %v364 = vunpack.c.l.b16 %v164
    %v365 = vunpack.c.l.b16 %v165
    %v366 = vunpack.c.l.b16 %v166
    %v367 = vunpack.c.l.b16 %v167
    %v368 = vunpack.c.l.b16 %v168
    %v369 = vunpack.c.l.b16 %v169
    %v370 = vunpack.c.l.b16 %v170
    %v371 = vunpack.c.l.b16 %v171
    %v372 = vunpack.c.l.b16 %v172
    %v373 = vunpack.c.l.b16 %v173
    %v374 = vunpack.c.l.b16 %v174
    %v375 = vunpack.c.l.b16 %v175
    %v376 = vunpack.c.l.b16 %v176
    %v377 = vunpack.c.l.b16 %v177
    %v378 = vunpack.c.l.b16 %v178
    %v379 = vunpack.c.l.b16 %v179
    %v380 = vunpack.c.l.b16 %v180
    %v381 = vunpack.c.l.b16 %v181
    %v382 = vunpack.c.l.b16 %v182
    %v383 = vunpack.c.l.b16 %v183
    %v384 = vunpack.c.l.b16 %v184
    %v385 = vunpack.c.l.b16 %v185
    %v386 = vunpack.c.l.b16 %v186
    %v387 = vunpack.c.l.b16 %v187
    %v388 = vpack.c.b16 %v291, %v290
    %v389 = vpack.c.b16 %v293, %v292
    %v390 = vpack.c.b16 %v295, %v294
    %v391 = vpack.c.b16 %v297, %v296
    %v392 = vpack.c.b16 %v299, %v298
    %v393 = vpack.c.b16 %v301, %v300
    %v394 = vpack.c.b16 %v303, %v302
    %v395 = vpack.c.b16 %v305, %v304
    %v396 = vpack.c.b16 %v307, %v306
    %v397 = vpack.c.b16 %v309, %v308
    %v398 = vpack.c.b16 %v311, %v310
    %v399 = vpack.c.b16 %v313, %v312
    %v400 = vpack.c.b16 %v315, %v314
    %v401 = vpack.c.b16 %v317, %v316
    %v402 = vpack.c.b16 %v319, %v318
    %v403 = vpack.c.b16 %v321, %v320
    %v404 = vpack.c.b16 %v323, %v322
    %v405 = vpack.c.b16 %v325, %v324
    %v406 = vpack.c.b16 %v327, %v326
    %v407 = vpack.c.b16 %v329, %v328
    %v408 = vpack.c.b16 %v331, %v330
    %v409 = vpack.c.b16 %v333, %v332
    %v410 = vpack.c.b16 %v335, %v334
    %v411 = vpack.c.b16 %v337, %v336
    %v412 = vpack.c.b16 %v339, %v338
    %v413 = vpack.c.b16 %v341, %v340
    %v414 = vpack.c.b16 %v343, %v342
    %v415 = vpack.c.b16 %v345, %v344
    %v416 = vpack.c.b16 %v347, %v346
    %v417 = vpack.c.b16 %v349, %v348
    %v418 = vpack.c.b16 %v351, %v350
    %v419 = vpack.c.b16 %v353, %v352
    %v420 = vpack.c.b16 %v355, %v354
    %v421 = vpack.c.b16 %v357, %v356
    %v422 = vpack.c.b16 %v359, %v358
    %v423 = vpack.c.b16 %v361, %v360
    %v424 = vpack.c.b16 %v363, %v362
    %v425 = vpack.c.b16 %v365, %v364
    %v426 = vpack.c.b16 %v367, %v366
    %v427 = vpack.c.b16 %v369, %v368
    %v428 = vpack.c.b16 %v371, %v370
    %v429 = vpack.c.b16 %v373, %v372
    %v430 = vpack.c.b16 %v375, %v374
    %v431 = vpack.c.b16 %v377, %v376
    %v432 = vpack.c.b16 %v379, %v378
    %v433 = vpack.c.b16 %v381, %v380
    %v434 = vpack.c.b16 %v383, %v382
    %v435 = vpack.c.b16 %v385, %v384
    %v436 = vpack.c.b16 %v387, %v386
    %vm486 = vcmask 130048
    %v488 = vsel %vm486, %v82, 0
    %v491 = vsel %vm486, %v89, 0
    %493 = vmatpush.bf16.msra.mxu0 %v395
    %494 = vmatpush.bf16.msra.mxu0 %v394
    %495 = vmatpush.bf16.msra.mxu0 %v393
    %496 = vmatpush.bf16.msra.mxu0 %v392
    %497 = vmatpush.bf16.msra.mxu0 %v391
    %498 = vmatpush.bf16.msra.mxu0 %v390
    %499 = vmatpush.bf16.msra.mxu0 %v389
    %500 = vmatpush.bf16.msra.mxu0 %v388
    %501 = vmatmul.bf16.gmra.mxu0 %v76
    %v502 = vpop.f32.mrf.mxu0
    %v503 = vadd.f32 %v190, %v502
    %v504 = vpop.f32.mrf.mxu0
    %v505 = vadd.f32 %v190, %v504
    %506 = vmatmul.bf16.gmra.mxu0 %v83
    %v507 = vpop.f32.mrf.mxu0
    %v508 = vadd.f32 %v190, %v507
    %v509 = vpop.f32.mrf.mxu0
    %v510 = vadd.f32 %v190, %v509
    %511 = vdwg.mxu0
    %512 = vmatpush.bf16.msra.mxu0 %v403
    %513 = vmatpush.bf16.msra.mxu0 %v402
    %514 = vmatpush.bf16.msra.mxu0 %v401
    %515 = vmatpush.bf16.msra.mxu0 %v400
    %516 = vmatpush.bf16.msra.mxu0 %v399
    %517 = vmatpush.bf16.msra.mxu0 %v398
    %518 = vmatpush.bf16.msra.mxu0 %v397
    %519 = vmatpush.bf16.msra.mxu0 %v396
    %520 = vmatmul.bf16.gmra.mxu0 %v77
    %v521 = vpop.f32.mrf.mxu0
    %v522 = vadd.f32 %v503, %v521
    %v523 = vpop.f32.mrf.mxu0
    %v524 = vadd.f32 %v505, %v523
    %525 = vmatmul.bf16.gmra.mxu0 %v84
    %v526 = vpop.f32.mrf.mxu0
    %v527 = vadd.f32 %v508, %v526
    %v528 = vpop.f32.mrf.mxu0
    %v529 = vadd.f32 %v510, %v528
    %530 = vdwg.mxu0
    %531 = vmatpush.bf16.msra.mxu0 %v411
    %532 = vmatpush.bf16.msra.mxu0 %v410
    %533 = vmatpush.bf16.msra.mxu0 %v409
    %534 = vmatpush.bf16.msra.mxu0 %v408
    %535 = vmatpush.bf16.msra.mxu0 %v407
    %536 = vmatpush.bf16.msra.mxu0 %v406
    %537 = vmatpush.bf16.msra.mxu0 %v405
    %538 = vmatpush.bf16.msra.mxu0 %v404
    %539 = vmatmul.bf16.gmra.mxu0 %v78
    %v540 = vpop.f32.mrf.mxu0
    %v541 = vadd.f32 %v522, %v540
    %v542 = vpop.f32.mrf.mxu0
    %v543 = vadd.f32 %v524, %v542
    %544 = vmatmul.bf16.gmra.mxu0 %v85
    %v545 = vpop.f32.mrf.mxu0
    %v546 = vadd.f32 %v527, %v545
    %v547 = vpop.f32.mrf.mxu0
    %v548 = vadd.f32 %v529, %v547
    %549 = vdwg.mxu0
    %550 = vmatpush.bf16.msra.mxu0 %v419
    %551 = vmatpush.bf16.msra.mxu0 %v418
    %552 = vmatpush.bf16.msra.mxu0 %v417
    %553 = vmatpush.bf16.msra.mxu0 %v416
    %554 = vmatpush.bf16.msra.mxu0 %v415
    %555 = vmatpush.bf16.msra.mxu0 %v414
    %556 = vmatpush.bf16.msra.mxu0 %v413
    %557 = vmatpush.bf16.msra.mxu0 %v412
    %558 = vmatmul.bf16.gmra.mxu0 %v79
    %v559 = vpop.f32.mrf.mxu0
    %v560 = vadd.f32 %v541, %v559
    %v561 = vpop.f32.mrf.mxu0
    %v562 = vadd.f32 %v543, %v561
    %563 = vmatmul.bf16.gmra.mxu0 %v86
    %v564 = vpop.f32.mrf.mxu0
    %v565 = vadd.f32 %v546, %v564
    %v566 = vpop.f32.mrf.mxu0
    %v567 = vadd.f32 %v548, %v566
    %568 = vdwg.mxu0
    %569 = vmatpush.bf16.msra.mxu0 %v427
    %570 = vmatpush.bf16.msra.mxu0 %v426
    %571 = vmatpush.bf16.msra.mxu0 %v425
    %572 = vmatpush.bf16.msra.mxu0 %v424
    %573 = vmatpush.bf16.msra.mxu0 %v423
    %574 = vmatpush.bf16.msra.mxu0 %v422
    %575 = vmatpush.bf16.msra.mxu0 %v421
    %576 = vmatpush.bf16.msra.mxu0 %v420
    %577 = vmatmul.bf16.gmra.mxu0 %v80
    %v578 = vpop.f32.mrf.mxu0
    %v579 = vadd.f32 %v560, %v578
    %v580 = vpop.f32.mrf.mxu0
    %v581 = vadd.f32 %v562, %v580
    %582 = vmatmul.bf16.gmra.mxu0 %v87
    %v583 = vpop.f32.mrf.mxu0
    %v584 = vadd.f32 %v565, %v583
    %v585 = vpop.f32.mrf.mxu0
    %v586 = vadd.f32 %v567, %v585
    %587 = vdwg.mxu0
    %588 = vmatpush.bf16.msra.mxu0 %v435
    %589 = vmatpush.bf16.msra.mxu0 %v434
    %590 = vmatpush.bf16.msra.mxu0 %v433
    %591 = vmatpush.bf16.msra.mxu0 %v432
    %592 = vmatpush.bf16.msra.mxu0 %v431
    %593 = vmatpush.bf16.msra.mxu0 %v430
    %594 = vmatpush.bf16.msra.mxu0 %v429
    %595 = vmatpush.bf16.msra.mxu0 %v428
    %596 = vmatmul.bf16.gmra.mxu0 %v81
    %v597 = vpop.f32.mrf.mxu0
    %v598 = vadd.f32 %v579, %v597
    %v599 = vpop.f32.mrf.mxu0
    %v600 = vadd.f32 %v581, %v599
    %601 = vmatmul.bf16.gmra.mxu0 %v88
    %v602 = vpop.f32.mrf.mxu0
    %v603 = vadd.f32 %v584, %v602
    %v604 = vpop.f32.mrf.mxu0
    %v605 = vadd.f32 %v586, %v604
    %606 = vdwg.mxu0
    %607 = vmatpush.bf16.msra.mxu0 0
    %608 = vmatpush.bf16.msra.mxu0 0
    %609 = vmatpush.bf16.msra.mxu0 0
    %610 = vmatpush.bf16.msra.mxu0 0
    %611 = vmatpush.bf16.msra.mxu0 0
    %612 = vmatpush.bf16.msra.mxu0 0
    %613 = vmatpush.bf16.msra.mxu0 0
    %614 = vmatpush.bf16.msra.mxu0 %v436
    %615 = vmatmul.bf16.gmra.mxu0 %v488
    %v616 = vpop.f32.mrf.mxu0
    %v617 = vadd.f32 %v598, %v616
    %v618 = vpop.f32.mrf.mxu0
    %v619 = vadd.f32 %v600, %v618
    %620 = vmatmul.bf16.gmra.mxu0 %v491
    %v621 = vpop.f32.mrf.mxu0
    %v622 = vadd.f32 %v603, %v621
    %v623 = vpop.f32.mrf.mxu0
    %v624 = vadd.f32 %v605, %v623
    %625 = vdwg.mxu0
    %v626 = vpack.c.bf16 %v617, %v617
    %v627 = vpack.c.bf16 %v619, %v619
    %v628 = vpack.c.bf16 %v622, %v622
    %v629 = vpack.c.bf16 %v624, %v624
    %630 = vst [vmem:[#allocation7] sm:$0xf] %v626
    %631 = vst [vmem:[#allocation7 + $0x4] sm:$0xf] %v627
    %632 = vst [vmem:[#allocation7 + $0x8] sm:$0xf] %v628
    %633 = vst [vmem:[#allocation7 + $0xc] sm:$0xf] %v629
    // Predicated region
    $region22: #{tpu_custom_call.1} parent=1 // pred_check
      _
    $region23: #{tpu_custom_call.1} parent=1 // pred_check_branch
      %635 = sbr.rel (0) target = $region25
    $region24: #{tpu_custom_call.1} parent=1 // pred_region
      %637 = vsyncadd [#allocation4], 0
      %s638 = sshll.u32 [#allocation7], 4
      %s639 = int_to_ptr.vmem [resolvable:$true] %s638
      %s640 = sshll.u32 %s3, 4
      %s641 = int_to_ptr.hbm [resolvable:$true] %s640
      %646 = dma.vmem_to_hbm [thread:$0]  %s639, 256, %s641, [#allocation4], 64, 64, 4
    $region25: #{tpu_custom_call.1} parent=1 // pred_fallthru
      _
    // Predicated region
    $region26: #{tpu_custom_call.1} parent=1 // pred_check
      _
    $region27: #{tpu_custom_call.1} parent=1 // pred_check_branch
      %648 = sbr.rel (0) target = $region29
    $region28: #{tpu_custom_call.1} parent=1 // pred_region
      %650 = dma.done [#allocation4], 256
    $region29: #{tpu_custom_call.1} parent=1 // pred_fallthru
      _
    %651 = vsyncpa [#allocation3], 1
    %652 = vsyncpa [#allocation6], 1
    %653 = vsyncpa [#allocation4], 1

</llo_original>
